<compile_context>
chip_gen: v6e
topology: v6e:2x2x1
jax: 0.10.0
libtpu: 0.0.40
codegen_flags: <defaults>
</compile_context>

<pallas_src>
import functools

import jax
import jax.numpy as jnp
from jax import lax
from jax.experimental import pallas as pl
from jax.experimental.pallas import tpu as pltpu


def _round_up(x, m):
    return ((x + m - 1) // m) * m


# --------------------------- Kernel A: MLP ----------------------------------
def _mlp_kernel(x_ref, w_ref, b_ref, gamma_ref, beta_ref, h_ref, *, out_feat):
    f_pad = h_ref.shape[-1]
    # Linear (MXU).  Padded K rows / N cols of x, w, b are zero, so
    # z[:, out_feat:] == 0 exactly.
    z = jnp.dot(x_ref[...], w_ref[...],
                preferred_element_type=jnp.float32) + b_ref[...]

    # LayerNorm over the *valid* out_feat columns only (biased var, eps=1e-5,
    # like torch.nn.LayerNorm).
    col = lax.broadcasted_iota(jnp.int32, (1, f_pad), 1)
    mask = (col < out_feat).astype(jnp.float32)
    mean = jnp.sum(z, axis=-1, keepdims=True) / out_feat
    zc = (z - mean) * mask
    var = jnp.sum(zc * zc, axis=-1, keepdims=True) / out_feat
    zn = zc * lax.rsqrt(var + 1e-5)

    # gamma/beta are zero-padded, so padded columns come out as exactly 0,
    # which also keeps them inert in the downstream max-aggregation.
    h_ref[...] = jnp.maximum(zn * gamma_ref[...] + beta_ref[...], 0.0)


# ---------------- Kernel B: max-aggregation + fused concat -------------------
def _aggregate_kernel(adj_ref, hsrc_ref, hdst_ref, out_ref):
    tm, ts = adj_ref.shape            # (dst tile rows, src tile cols), static
    f_pad = hsrc_ref.shape[-1]
    j = pl.program_id(1)              # src-tile index (reduction axis)

    @pl.when(j == 0)
    def _init():
        # Fused concat: left half is h itself; right half is the accumulator.
        out_ref[:, pl.ds(0, f_pad)] = hdst_ref[...]
        out_ref[:, pl.ds(f_pad, f_pad)] = jnp.zeros((tm, f_pad), jnp.float32)

    # h_N[i, f] = max_j adj[i, j] * h[j, f]
    # (valid because h >= 0 after ReLU and adj is in {0, 1}; zero-degree nodes
    #  naturally end up at 0, matching DGL's fill value for the max reduce).
    adj_f = adj_ref[...].astype(jnp.float32)          # (tm, ts)
    acc = jnp.zeros((tm, f_pad), jnp.float32)
    for s in range(ts):                               # statically unrolled
        a_col = adj_f[:, s:s + 1]                     # (tm, 1)
        h_row = hsrc_ref[pl.ds(s, 1), :]              # (1, f_pad)
        acc = jnp.maximum(acc, a_col * h_row)

    cur = out_ref[:, pl.ds(f_pad, f_pad)]
    out_ref[:, pl.ds(f_pad, f_pad)] = jnp.maximum(cur, acc)


# ------------------------------ Wrapper --------------------------------------
def gnn_layer_forward(adj, h, w, b, gamma, beta):
    """adj: (N, N) 0/1 float32 with adj[i, j] = 1 iff edge j -> i.
    h: (N, in_feat) float32.  Returns (N, 2*out_feat) float32."""
    n, in_feat = h.shape
    out_feat = w.shape[1]

    in_pad = _round_up(in_feat, 128)
    f_pad = _round_up(out_feat, 128)
    if n <= 128:
        n_pad = _round_up(n, 16)
        tm = ts = n_pad                   # single tile for small graphs
    else:
        n_pad = _round_up(n, 128)
        tm = ts = 128
    tn = tm                               # MLP row tile

    def pad2(x, r, c):
        return jnp.pad(x, ((0, r - x.shape[0]), (0, c - x.shape[1])))

    x_p = pad2(h.astype(jnp.float32), n_pad, in_pad)
    w_p = pad2(w.astype(jnp.float32), in_pad, f_pad)
    b_p = pad2(b.reshape(1, -1).astype(jnp.float32), 1, f_pad)
    g_p = pad2(gamma.reshape(1, -1).astype(jnp.float32), 1, f_pad)
    be_p = pad2(beta.reshape(1, -1).astype(jnp.float32), 1, f_pad)
    # bf16 adjacency: halves the dominant N^2 HBM stream, 0/1 are exact.
    adj_p = pad2(adj, n_pad, n_pad).astype(jnp.bfloat16)

    # ---- Kernel A: h = ReLU(LayerNorm(x @ W + b)) ---------------------------
    h_full = pl.pallas_call(
        functools.partial(_mlp_kernel, out_feat=out_feat),
        out_shape=jax.ShapeDtypeStruct((n_pad, f_pad), jnp.float32),
        grid=(n_pad // tn,),
        in_specs=[
            pl.BlockSpec((tn, in_pad), lambda i: (i, 0)),
            pl.BlockSpec((in_pad, f_pad), lambda i: (0, 0)),
            pl.BlockSpec((1, f_pad), lambda i: (0, 0)),
            pl.BlockSpec((1, f_pad), lambda i: (0, 0)),
            pl.BlockSpec((1, f_pad), lambda i: (0, 0)),
        ],
        out_specs=pl.BlockSpec((tn, f_pad), lambda i: (i, 0)),
        compiler_params=pltpu.CompilerParams(
            dimension_semantics=("parallel",)),
    )(x_p, w_p, b_p, g_p, be_p)

    # ---- Kernel B: fused [h | max-aggregate(h)] -----------------------------
    fused = pl.pallas_call(
        _aggregate_kernel,
        out_shape=jax.ShapeDtypeStruct((n_pad, 2 * f_pad), jnp.float32),
        grid=(n_pad // tm, n_pad // ts),
        in_specs=[
            pl.BlockSpec((tm, ts), lambda i, j: (i, j)),     # adj tile (dst, src)
            pl.BlockSpec((ts, f_pad), lambda i, j: (j, 0)),  # h rows of src tile
            pl.BlockSpec((tm, f_pad), lambda i, j: (i, 0)),  # h rows of dst tile
        ],
        out_specs=pl.BlockSpec((tm, 2 * f_pad), lambda i, j: (i, 0)),
        compiler_params=pltpu.CompilerParams(
            dimension_semantics=("parallel", "arbitrary")),
    )(adj_p, h_full, h_full)

    if n_pad == n and f_pad == out_feat:
        return fused                      # already exactly concat([h, h_N], 1)
    return jnp.concatenate(
        [fused[:n, :out_feat], fused[:n, f_pad:f_pad + out_feat]], axis=1)


# ------------------------------ Reference ------------------------------------
def _reference(adj, h, w, b, gamma, beta):
    z = h @ w + b
    mean = jnp.mean(z, axis=-1, keepdims=True)
    var = jnp.mean((z - mean) ** 2, axis=-1, keepdims=True)
    zn = (z - mean) / jnp.sqrt(var + 1e-5) * gamma + beta
    hh = jnp.maximum(zn, 0.0)
    masked = jnp.where(adj[:, :, None] > 0, hh[None, :, :], -jnp.inf)
    hn = jnp.max(masked, axis=1)
    deg = jnp.sum(adj, axis=1, keepdims=True)
    hn = jnp.where(deg > 0, hn, 0.0)
    return jnp.concatenate([hh, hn], axis=1)


if __name__ == "__main__":
    N = 16          # number of graph nodes
    IN_FEAT = 32
    OUT_FEAT = 32

    key = jax.random.PRNGKey(0)
    k_h, k_w, k_b, k_adj = jax.random.split(key, 4)

    # Deterministic parameter init (Linear: uniform(+-1/sqrt(in)), LN: ones/zeros).
    lim = 1.0 / (IN_FEAT ** 0.5)
    w = jax.random.uniform(k_w, (IN_FEAT, OUT_FEAT), jnp.float32, -lim, lim)
    b = jax.random.uniform(k_b, (OUT_FEAT,), jnp.float32, -lim, lim)
    gamma = jnp.ones((OUT_FEAT,), jnp.float32)
    beta = jnp.zeros((OUT_FEAT,), jnp.float32)

    # Node features and a random directed graph (adj[dst, src] = edge src->dst).
    h = jax.random.normal(k_h, (N, IN_FEAT), jnp.float32)
    adj = (jax.random.uniform(k_adj, (N, N)) < 0.3).astype(jnp.float32)

    out = jax.jit(gnn_layer_forward)(adj, h, w, b, gamma, beta)
    out = jax.block_until_ready(out)

    ref = _reference(adj, h, w, b, gamma, beta)
    assert out.shape == (N, 2 * OUT_FEAT), out.shape
    assert jnp.allclose(out, ref, atol=2e-5, rtol=2e-5), "mismatch vs reference"

    print("KERNEL_OK")
</pallas_src>

<mosaic_0001>
module attributes {stable_mosaic.version = 11 : i64} {
  func.func @_mlp_kernel(%arg0: i32, %arg1: memref<16x128xf32, #tpu.memory_space<vmem>>, %arg2: memref<128x128xf32, #tpu.memory_space<vmem>>, %arg3: memref<1x128xf32, #tpu.memory_space<vmem>>, %arg4: memref<1x128xf32, #tpu.memory_space<vmem>>, %arg5: memref<1x128xf32, #tpu.memory_space<vmem>>, %arg6: memref<16x128xf32, #tpu.memory_space<vmem>>) attributes {dimension_semantics = [#tpu.dimension_semantics<parallel>], iteration_bounds = array<i64: 1>, scalar_prefetch = 0 : i64, scratch_operands = 0 : i64, tpu.core_type = #tpu.core_type<tc>, window_params = [{transform_indices = @transform_0, window_bounds = array<i64: 16, 128>}, {pipeline_mode = #tpu.pipeline_mode<synchronous>, transform_indices = @transform_1, window_bounds = array<i64: 128, 128>}, {pipeline_mode = #tpu.pipeline_mode<synchronous>, transform_indices = @transform_2, window_bounds = array<i64: 1, 128>}, {pipeline_mode = #tpu.pipeline_mode<synchronous>, transform_indices = @transform_3, window_bounds = array<i64: 1, 128>}, {pipeline_mode = #tpu.pipeline_mode<synchronous>, transform_indices = @transform_4, window_bounds = array<i64: 1, 128>}, {transform_indices = @transform_5, window_bounds = array<i64: 16, 128>}]} {
    %c0 = arith.constant 0 : index
    %c0_0 = arith.constant 0 : index
    %0 = vector.load %arg1[%c0, %c0_0] : memref<16x128xf32, #tpu.memory_space<vmem>>, vector<16x128xf32>
    %c0_1 = arith.constant 0 : index
    %c0_2 = arith.constant 0 : index
    %1 = vector.load %arg2[%c0_1, %c0_2] : memref<128x128xf32, #tpu.memory_space<vmem>>, vector<128x128xf32>
    %cst = arith.constant dense<0.000000e+00> : vector<16x128xf32>
    %2 = tpu.matmul %0, %1, %cst {dimension_numbers = #tpu.dot_dimension_numbers<[1], [0], [0], [1], [0, 0, 1, 1], [], []>} : vector<16x128xf32>, vector<128x128xf32>, vector<16x128xf32> -> vector<16x128xf32>
    %c0_3 = arith.constant 0 : index
    %c0_4 = arith.constant 0 : index
    %3 = vector.load %arg3[%c0_3, %c0_4] : memref<1x128xf32, #tpu.memory_space<vmem>>, vector<1x128xf32>
    %4 = vector.broadcast %3 : vector<1x128xf32> to vector<16x128xf32>
    %5 = arith.addf %2, %4 : vector<16x128xf32>
    %6 = tpu.iota {dimensions = array<i32: 1>} : vector<1x128xi32>
    %c32_i32 = arith.constant 32 : i32
    %7 = vector.broadcast %c32_i32 : i32 to vector<1x128xi32>
    %8 = arith.cmpi slt, %6, %7 : vector<1x128xi32>
    %9 = arith.extui %8 : vector<1x128xi1> to vector<1x128xi32>
    %10 = arith.sitofp %9 : vector<1x128xi32> to vector<1x128xf32>
    %cst_5 = arith.constant dense<0.000000e+00> : vector<16xf32>
    %11 = vector.multi_reduction <add>, %5, %cst_5 [1] : vector<16x128xf32> to vector<16xf32>
    %12 = vector.shape_cast %11 : vector<16xf32> to vector<16x1xf32>
    %cst_6 = arith.constant 3.200000e+01 : f32
    %13 = vector.broadcast %cst_6 : f32 to vector<16x1xf32>
    %14 = arith.divf %12, %13 : vector<16x1xf32>
    %15 = vector.broadcast %14 : vector<16x1xf32> to vector<16x128xf32>
    %16 = arith.subf %5, %15 : vector<16x128xf32>
    %17 = vector.broadcast %10 : vector<1x128xf32> to vector<16x128xf32>
    %18 = arith.mulf %16, %17 : vector<16x128xf32>
    %19 = arith.mulf %18, %18 : vector<16x128xf32>
    %cst_7 = arith.constant dense<0.000000e+00> : vector<16xf32>
    %20 = vector.multi_reduction <add>, %19, %cst_7 [1] : vector<16x128xf32> to vector<16xf32>
    %21 = vector.shape_cast %20 : vector<16xf32> to vector<16x1xf32>
    %cst_8 = arith.constant 3.200000e+01 : f32
    %22 = vector.broadcast %cst_8 : f32 to vector<16x1xf32>
    %23 = arith.divf %21, %22 : vector<16x1xf32>
    %cst_9 = arith.constant 9.99999974E-6 : f32
    %24 = vector.broadcast %cst_9 : f32 to vector<16x1xf32>
    %25 = arith.addf %23, %24 : vector<16x1xf32>
    %26 = math.rsqrt %25 : vector<16x1xf32>
    %27 = vector.broadcast %26 : vector<16x1xf32> to vector<16x128xf32>
    %28 = arith.mulf %18, %27 : vector<16x128xf32>
    %c0_10 = arith.constant 0 : index
    %c0_11 = arith.constant 0 : index
    %29 = vector.load %arg4[%c0_10, %c0_11] : memref<1x128xf32, #tpu.memory_space<vmem>>, vector<1x128xf32>
    %30 = vector.broadcast %29 : vector<1x128xf32> to vector<16x128xf32>
    %31 = arith.mulf %28, %30 : vector<16x128xf32>
    %c0_12 = arith.constant 0 : index
    %c0_13 = arith.constant 0 : index
    %32 = vector.load %arg5[%c0_12, %c0_13] : memref<1x128xf32, #tpu.memory_space<vmem>>, vector<1x128xf32>
    %33 = vector.broadcast %32 : vector<1x128xf32> to vector<16x128xf32>
    %34 = arith.addf %31, %33 : vector<16x128xf32>
    %cst_14 = arith.constant 0.000000e+00 : f32
    %35 = vector.broadcast %cst_14 : f32 to vector<16x128xf32>
    %36 = arith.maximumf %34, %35 : vector<16x128xf32>
    %c0_15 = arith.constant 0 : index
    %c0_16 = arith.constant 0 : index
    %37 = vector.load %arg6[%c0_15, %c0_16] : memref<16x128xf32, #tpu.memory_space<vmem>>, vector<16x128xf32>
    tpu.vector_store %arg6[%c0_15, %c0_16], %36 {strides = array<i32>} : memref<16x128xf32, #tpu.memory_space<vmem>>, vector<16x128xf32>,
    return
  }
  func.func @transform_0(%arg0: i32) -> (i32, i32) {
    %c0_i32 = arith.constant 0 : i32
    %c0_i32_0 = arith.constant 0 : i32
    return %arg0, %c0_i32 : i32, i32
  }
  func.func @transform_1(%arg0: i32) -> (i32, i32) {
    %c0_i32 = arith.constant 0 : i32
    %c0_i32_0 = arith.constant 0 : i32
    %c0_i32_1 = arith.constant 0 : i32
    return %c0_i32, %c0_i32_0 : i32, i32
  }
  func.func @transform_2(%arg0: i32) -> (i32, i32) {
    %c0_i32 = arith.constant 0 : i32
    %c0_i32_0 = arith.constant 0 : i32
    %c0_i32_1 = arith.constant 0 : i32
    return %c0_i32, %c0_i32_0 : i32, i32
  }
  func.func @transform_3(%arg0: i32) -> (i32, i32) {
    %c0_i32 = arith.constant 0 : i32
    %c0_i32_0 = arith.constant 0 : i32
    %c0_i32_1 = arith.constant 0 : i32
    return %c0_i32, %c0_i32_0 : i32, i32
  }
  func.func @transform_4(%arg0: i32) -> (i32, i32) {
    %c0_i32 = arith.constant 0 : i32
    %c0_i32_0 = arith.constant 0 : i32
    %c0_i32_1 = arith.constant 0 : i32
    return %c0_i32, %c0_i32_0 : i32, i32
  }
  func.func @transform_5(%arg0: i32) -> (i32, i32) {
    %c0_i32 = arith.constant 0 : i32
    %c0_i32_0 = arith.constant 0 : i32
    return %arg0, %c0_i32 : i32, i32
  }
}

module attributes {stable_mosaic.version = 11 : i64} {
  func.func @_aggregate_kernel(%arg0: i32, %arg1: i32, %arg2: memref<16x16xbf16, #tpu.memory_space<vmem>>, %arg3: memref<16x128xf32, #tpu.memory_space<vmem>>, %arg4: memref<16x128xf32, #tpu.memory_space<vmem>>, %arg5: memref<16x256xf32, #tpu.memory_space<vmem>>) attributes {dimension_semantics = [#tpu.dimension_semantics<parallel>, #tpu.dimension_semantics<arbitrary>], iteration_bounds = array<i64: 1, 1>, scalar_prefetch = 0 : i64, scratch_operands = 0 : i64, tpu.core_type = #tpu.core_type<tc>, window_params = [{transform_indices = @transform_0, window_bounds = array<i64: 16, 16>}, {transform_indices = @transform_1, window_bounds = array<i64: 16, 128>}, {transform_indices = @transform_2, window_bounds = array<i64: 16, 128>}, {transform_indices = @transform_3, window_bounds = array<i64: 16, 256>}]} {
    %c0_i32 = arith.constant 0 : i32
    %0 = arith.cmpi eq, %arg1, %c0_i32 : i32
    %1 = arith.extui %0 : i1 to i32
    %c0_i32_0 = arith.constant 0 : i32
    %2 = arith.cmpi ne, %1, %c0_i32_0 : i32
    scf.if %2 {
      %c0_22 = arith.constant 0 : index
      %c0_23 = arith.constant 0 : index
      %105 = vector.load %arg4[%c0_22, %c0_23] : memref<16x128xf32, #tpu.memory_space<vmem>>, vector<16x128xf32>
      %c0_24 = arith.constant 0 : index
      %c0_25 = arith.constant 0 : index
      %106 = vector.load %arg5[%c0_24, %c0_25] : memref<16x256xf32, #tpu.memory_space<vmem>>, vector<16x128xf32>
      tpu.vector_store %arg5[%c0_24, %c0_25], %105 {strides = array<i32>} : memref<16x256xf32, #tpu.memory_space<vmem>>, vector<16x128xf32>,
      %cst_26 = arith.constant 0.000000e+00 : f32
      %107 = vector.broadcast %cst_26 : f32 to vector<16x128xf32>
      %c0_27 = arith.constant 0 : index
      %c128_28 = arith.constant 128 : index
      %108 = vector.load %arg5[%c0_27, %c128_28] : memref<16x256xf32, #tpu.memory_space<vmem>>, vector<16x128xf32>
      tpu.vector_store %arg5[%c0_27, %c128_28], %107 {strides = array<i32>} : memref<16x256xf32, #tpu.memory_space<vmem>>, vector<16x128xf32>,
    } else {
    }
    %c0 = arith.constant 0 : index
    %c0_1 = arith.constant 0 : index
    %3 = vector.load %arg2[%c0, %c0_1] : memref<16x16xbf16, #tpu.memory_space<vmem>>, vector<16x16xbf16>
    %4 = arith.extf %3 : vector<16x16xbf16> to vector<16x16xf32>
    %cst = arith.constant 0.000000e+00 : f32
    %5 = vector.broadcast %cst : f32 to vector<16x128xf32>
    %6 = vector.extract_strided_slice %4 {offsets = [0, 0], sizes = [16, 1], strides = [1, 1]} : vector<16x16xf32> to vector<16x1xf32>
    %c0_2 = arith.constant 0 : index
    %c0_3 = arith.constant 0 : index
    %7 = vector.load %arg3[%c0_2, %c0_3] : memref<16x128xf32, #tpu.memory_space<vmem>>, vector<1x128xf32>
    %8 = vector.broadcast %6 : vector<16x1xf32> to vector<16x128xf32>
    %9 = vector.broadcast %7 : vector<1x128xf32> to vector<16x128xf32>
    %10 = arith.mulf %8, %9 : vector<16x128xf32>
    %11 = arith.maximumf %5, %10 : vector<16x128xf32>
    %12 = vector.extract_strided_slice %4 {offsets = [0, 1], sizes = [16, 1], strides = [1, 1]} : vector<16x16xf32> to vector<16x1xf32>
    %c1 = arith.constant 1 : index
    %c0_4 = arith.constant 0 : index
    %13 = vector.load %arg3[%c1, %c0_4] : memref<16x128xf32, #tpu.memory_space<vmem>>, vector<1x128xf32>
    %14 = vector.broadcast %12 : vector<16x1xf32> to vector<16x128xf32>
    %15 = vector.broadcast %13 : vector<1x128xf32> to vector<16x128xf32>
    %16 = arith.mulf %14, %15 : vector<16x128xf32>
    %17 = arith.maximumf %11, %16 : vector<16x128xf32>
    %18 = vector.extract_strided_slice %4 {offsets = [0, 2], sizes = [16, 1], strides = [1, 1]} : vector<16x16xf32> to vector<16x1xf32>
    %c2 = arith.constant 2 : index
    %c0_5 = arith.constant 0 : index
    %19 = vector.load %arg3[%c2, %c0_5] : memref<16x128xf32, #tpu.memory_space<vmem>>, vector<1x128xf32>
    %20 = vector.broadcast %18 : vector<16x1xf32> to vector<16x128xf32>
    %21 = vector.broadcast %19 : vector<1x128xf32> to vector<16x128xf32>
    %22 = arith.mulf %20, %21 : vector<16x128xf32>
    %23 = arith.maximumf %17, %22 : vector<16x128xf32>
    %24 = vector.extract_strided_slice %4 {offsets = [0, 3], sizes = [16, 1], strides = [1, 1]} : vector<16x16xf32> to vector<16x1xf32>
    %c3 = arith.constant 3 : index
    %c0_6 = arith.constant 0 : index
    %25 = vector.load %arg3[%c3, %c0_6] : memref<16x128xf32, #tpu.memory_space<vmem>>, vector<1x128xf32>
    %26 = vector.broadcast %24 : vector<16x1xf32> to vector<16x128xf32>
    %27 = vector.broadcast %25 : vector<1x128xf32> to vector<16x128xf32>
    %28 = arith.mulf %26, %27 : vector<16x128xf32>
    %29 = arith.maximumf %23, %28 : vector<16x128xf32>
    %30 = vector.extract_strided_slice %4 {offsets = [0, 4], sizes = [16, 1], strides = [1, 1]} : vector<16x16xf32> to vector<16x1xf32>
    %c4 = arith.constant 4 : index
    %c0_7 = arith.constant 0 : index
    %31 = vector.load %arg3[%c4, %c0_7] : memref<16x128xf32, #tpu.memory_space<vmem>>, vector<1x128xf32>
    %32 = vector.broadcast %30 : vector<16x1xf32> to vector<16x128xf32>
    %33 = vector.broadcast %31 : vector<1x128xf32> to vector<16x128xf32>
    %34 = arith.mulf %32, %33 : vector<16x128xf32>
    %35 = arith.maximumf %29, %34 : vector<16x128xf32>
    %36 = vector.extract_strided_slice %4 {offsets = [0, 5], sizes = [16, 1], strides = [1, 1]} : vector<16x16xf32> to vector<16x1xf32>
    %c5 = arith.constant 5 : index
    %c0_8 = arith.constant 0 : index
    %37 = vector.load %arg3[%c5, %c0_8] : memref<16x128xf32, #tpu.memory_space<vmem>>, vector<1x128xf32>
    %38 = vector.broadcast %36 : vector<16x1xf32> to vector<16x128xf32>
    %39 = vector.broadcast %37 : vector<1x128xf32> to vector<16x128xf32>
    %40 = arith.mulf %38, %39 : vector<16x128xf32>
    %41 = arith.maximumf %35, %40 : vector<16x128xf32>
    %42 = vector.extract_strided_slice %4 {offsets = [0, 6], sizes = [16, 1], strides = [1, 1]} : vector<16x16xf32> to vector<16x1xf32>
    %c6 = arith.constant 6 : index
    %c0_9 = arith.constant 0 : index
    %43 = vector.load %arg3[%c6, %c0_9] : memref<16x128xf32, #tpu.memory_space<vmem>>, vector<1x128xf32>
    %44 = vector.broadcast %42 : vector<16x1xf32> to vector<16x128xf32>
    %45 = vector.broadcast %43 : vector<1x128xf32> to vector<16x128xf32>
    %46 = arith.mulf %44, %45 : vector<16x128xf32>
    %47 = arith.maximumf %41, %46 : vector<16x128xf32>
    %48 = vector.extract_strided_slice %4 {offsets = [0, 7], sizes = [16, 1], strides = [1, 1]} : vector<16x16xf32> to vector<16x1xf32>
    %c7 = arith.constant 7 : index
    %c0_10 = arith.constant 0 : index
    %49 = vector.load %arg3[%c7, %c0_10] : memref<16x128xf32, #tpu.memory_space<vmem>>, vector<1x128xf32>
    %50 = vector.broadcast %48 : vector<16x1xf32> to vector<16x128xf32>
    %51 = vector.broadcast %49 : vector<1x128xf32> to vector<16x128xf32>
    %52 = arith.mulf %50, %51 : vector<16x128xf32>
    %53 = arith.maximumf %47, %52 : vector<16x128xf32>
    %54 = vector.extract_strided_slice %4 {offsets = [0, 8], sizes = [16, 1], strides = [1, 1]} : vector<16x16xf32> to vector<16x1xf32>
    %c8 = arith.constant 8 : index
    %c0_11 = arith.constant 0 : index
    %55 = vector.load %arg3[%c8, %c0_11] : memref<16x128xf32, #tpu.memory_space<vmem>>, vector<1x128xf32>
    %56 = vector.broadcast %54 : vector<16x1xf32> to vector<16x128xf32>
    %57 = vector.broadcast %55 : vector<1x128xf32> to vector<16x128xf32>
    %58 = arith.mulf %56, %57 : vector<16x128xf32>
    %59 = arith.maximumf %53, %58 : vector<16x128xf32>
    %60 = vector.extract_strided_slice %4 {offsets = [0, 9], sizes = [16, 1], strides = [1, 1]} : vector<16x16xf32> to vector<16x1xf32>
    %c9 = arith.constant 9 : index
    %c0_12 = arith.constant 0 : index
    %61 = vector.load %arg3[%c9, %c0_12] : memref<16x128xf32, #tpu.memory_space<vmem>>, vector<1x128xf32>
    %62 = vector.broadcast %60 : vector<16x1xf32> to vector<16x128xf32>
    %63 = vector.broadcast %61 : vector<1x128xf32> to vector<16x128xf32>
    %64 = arith.mulf %62, %63 : vector<16x128xf32>
    %65 = arith.maximumf %59, %64 : vector<16x128xf32>
    %66 = vector.extract_strided_slice %4 {offsets = [0, 10], sizes = [16, 1], strides = [1, 1]} : vector<16x16xf32> to vector<16x1xf32>
    %c10 = arith.constant 10 : index
    %c0_13 = arith.constant 0 : index
    %67 = vector.load %arg3[%c10, %c0_13] : memref<16x128xf32, #tpu.memory_space<vmem>>, vector<1x128xf32>
    %68 = vector.broadcast %66 : vector<16x1xf32> to vector<16x128xf32>
    %69 = vector.broadcast %67 : vector<1x128xf32> to vector<16x128xf32>
    %70 = arith.mulf %68, %69 : vector<16x128xf32>
    %71 = arith.maximumf %65, %70 : vector<16x128xf32>
    %72 = vector.extract_strided_slice %4 {offsets = [0, 11], sizes = [16, 1], strides = [1, 1]} : vector<16x16xf32> to vector<16x1xf32>
    %c11 = arith.constant 11 : index
    %c0_14 = arith.constant 0 : index
    %73 = vector.load %arg3[%c11, %c0_14] : memref<16x128xf32, #tpu.memory_space<vmem>>, vector<1x128xf32>
    %74 = vector.broadcast %72 : vector<16x1xf32> to vector<16x128xf32>
    %75 = vector.broadcast %73 : vector<1x128xf32> to vector<16x128xf32>
    %76 = arith.mulf %74, %75 : vector<16x128xf32>
    %77 = arith.maximumf %71, %76 : vector<16x128xf32>
    %78 = vector.extract_strided_slice %4 {offsets = [0, 12], sizes = [16, 1], strides = [1, 1]} : vector<16x16xf32> to vector<16x1xf32>
    %c12 = arith.constant 12 : index
    %c0_15 = arith.constant 0 : index
    %79 = vector.load %arg3[%c12, %c0_15] : memref<16x128xf32, #tpu.memory_space<vmem>>, vector<1x128xf32>
    %80 = vector.broadcast %78 : vector<16x1xf32> to vector<16x128xf32>
    %81 = vector.broadcast %79 : vector<1x128xf32> to vector<16x128xf32>
    %82 = arith.mulf %80, %81 : vector<16x128xf32>
    %83 = arith.maximumf %77, %82 : vector<16x128xf32>
    %84 = vector.extract_strided_slice %4 {offsets = [0, 13], sizes = [16, 1], strides = [1, 1]} : vector<16x16xf32> to vector<16x1xf32>
    %c13 = arith.constant 13 : index
    %c0_16 = arith.constant 0 : index
    %85 = vector.load %arg3[%c13, %c0_16] : memref<16x128xf32, #tpu.memory_space<vmem>>, vector<1x128xf32>
    %86 = vector.broadcast %84 : vector<16x1xf32> to vector<16x128xf32>
    %87 = vector.broadcast %85 : vector<1x128xf32> to vector<16x128xf32>
    %88 = arith.mulf %86, %87 : vector<16x128xf32>
    %89 = arith.maximumf %83, %88 : vector<16x128xf32>
    %90 = vector.extract_strided_slice %4 {offsets = [0, 14], sizes = [16, 1], strides = [1, 1]} : vector<16x16xf32> to vector<16x1xf32>
    %c14 = arith.constant 14 : index
    %c0_17 = arith.constant 0 : index
    %91 = vector.load %arg3[%c14, %c0_17] : memref<16x128xf32, #tpu.memory_space<vmem>>, vector<1x128xf32>
    %92 = vector.broadcast %90 : vector<16x1xf32> to vector<16x128xf32>
    %93 = vector.broadcast %91 : vector<1x128xf32> to vector<16x128xf32>
    %94 = arith.mulf %92, %93 : vector<16x128xf32>
    %95 = arith.maximumf %89, %94 : vector<16x128xf32>
    %96 = vector.extract_strided_slice %4 {offsets = [0, 15], sizes = [16, 1], strides = [1, 1]} : vector<16x16xf32> to vector<16x1xf32>
    %c15 = arith.constant 15 : index
    %c0_18 = arith.constant 0 : index
    %97 = vector.load %arg3[%c15, %c0_18] : memref<16x128xf32, #tpu.memory_space<vmem>>, vector<1x128xf32>
    %98 = vector.broadcast %96 : vector<16x1xf32> to vector<16x128xf32>
    %99 = vector.broadcast %97 : vector<1x128xf32> to vector<16x128xf32>
    %100 = arith.mulf %98, %99 : vector<16x128xf32>
    %101 = arith.maximumf %95, %100 : vector<16x128xf32>
    %c0_19 = arith.constant 0 : index
    %c128 = arith.constant 128 : index
    %102 = vector.load %arg5[%c0_19, %c128] : memref<16x256xf32, #tpu.memory_space<vmem>>, vector<16x128xf32>
    %103 = arith.maximumf %102, %101 : vector<16x128xf32>
    %c0_20 = arith.constant 0 : index
    %c128_21 = arith.constant 128 : index
    %104 = vector.load %arg5[%c0_20, %c128_21] : memref<16x256xf32, #tpu.memory_space<vmem>>, vector<16x128xf32>
    tpu.vector_store %arg5[%c0_20, %c128_21], %103 {strides = array<i32>} : memref<16x256xf32, #tpu.memory_space<vmem>>, vector<16x128xf32>,
    return
  }
  func.func @transform_0(%arg0: i32, %arg1: i32) -> (i32, i32) {
    %c0_i32 = arith.constant 0 : i32
    return %arg0, %arg1 : i32, i32
  }
  func.func @transform_1(%arg0: i32, %arg1: i32) -> (i32, i32) {
    %c0_i32 = arith.constant 0 : i32
    %c0_i32_0 = arith.constant 0 : i32
    return %arg1, %c0_i32 : i32, i32
  }
  func.func @transform_2(%arg0: i32, %arg1: i32) -> (i32, i32) {
    %c0_i32 = arith.constant 0 : i32
    %c0_i32_0 = arith.constant 0 : i32
    return %arg0, %c0_i32 : i32, i32
  }
  func.func @transform_3(%arg0: i32, %arg1: i32) -> (i32, i32) {
    %c0_i32 = arith.constant 0 : i32
    %c0_i32_0 = arith.constant 0 : i32
    return %arg0, %c0_i32 : i32, i32
  }
}

</mosaic_0001>

<llo_original>
// kernel: gnn_layer_forward.2
$region0: #{gnn_layer_forward.2}
  #allocation0 [shape = 'u32[]', space=smem, size = 0x4, offset = 0x4, fixed_abs, tag = 'smem constant byte address 0x4 - core index']
  #allocation1 [shape = 'u32[144,128]{1,0:T(1,128)}', space=vmem, size = 0x12000, scoped, tag = 'internal scratch']
  %s0 = inlined_call_operand.vmem [shape: f32[16,128], index: 0, kind: input, shape index: {}]
  %s1 = inlined_call_operand.vmem [shape: f32[128,128], index: 1, kind: input, shape index: {}]
  %s2 = inlined_call_operand.vmem [shape: f32[1,128], index: 2, kind: input, shape index: {}]
  %s3 = inlined_call_operand.vmem [shape: f32[1,128], index: 3, kind: input, shape index: {}]
  %s4 = inlined_call_operand.vmem [shape: f32[1,128], index: 4, kind: input, shape index: {}]
  %s5 = inlined_call_operand.vmem [shape: f32[16,128], index: 5, kind: output, shape index: {}]
  %s6 = sld [smem:[#allocation0]]
  $region30: #{gnn_layer_forward.2} parent=0
    _
  %s8 = ssub.s32 1, %s6
  %s9 = scalar_select 0, %s8, %s6
  // Predicated region
  $region2: #{gnn_layer_forward.2} parent=0 // pred_check
    _
  $region3: #{gnn_layer_forward.2} parent=0 // pred_check_branch
    %11 = sbr.rel (0) target = $region5
  $region4: #{gnn_layer_forward.2} parent=0 // pred_region
    _
  $region5: #{gnn_layer_forward.2} parent=0 // pred_fallthru
    _
  // Predicated region
  $region6: #{gnn_layer_forward.2} parent=0 // pred_check
    _
  $region7: #{gnn_layer_forward.2} parent=0 // pred_check_branch
    %13 = sbr.rel (0) target = $region9
  $region8: #{gnn_layer_forward.2} parent=0 // pred_region
    _
  $region9: #{gnn_layer_forward.2} parent=0 // pred_fallthru
    _
  // Predicated region
  $region10: #{gnn_layer_forward.2} parent=0 // pred_check
    _
  $region11: #{gnn_layer_forward.2} parent=0 // pred_check_branch
    %15 = sbr.rel (0) target = $region13
  $region12: #{gnn_layer_forward.2} parent=0 // pred_region
    _
  $region13: #{gnn_layer_forward.2} parent=0 // pred_fallthru
    _
  // Predicated region
  $region14: #{gnn_layer_forward.2} parent=0 // pred_check
    _
  $region15: #{gnn_layer_forward.2} parent=0 // pred_check_branch
    %17 = sbr.rel (0) target = $region17
  $region16: #{gnn_layer_forward.2} parent=0 // pred_region
    _
  $region17: #{gnn_layer_forward.2} parent=0 // pred_fallthru
    _
  // Predicated region
  $region18: #{gnn_layer_forward.2} parent=0 // pred_check
    _
  $region19: #{gnn_layer_forward.2} parent=0 // pred_check_branch
    %19 = sbr.rel (0) target = $region21
  $region20: #{gnn_layer_forward.2} parent=0 // pred_region
    _
  $region21: #{gnn_layer_forward.2} parent=0 // pred_fallthru
    _
  %v20 = vld [vmem:[%s0] sm:$0xff]
  %v21 = vld [vmem:[%s0 + $0x8] sm:$0xff]
  %v22 = vld [vmem:[%s1] sm:$0xff]
  %v23 = vld [vmem:[%s1 + $0x8] sm:$0xff]
  %v24 = vld [vmem:[%s1 + $0x10] sm:$0xff]
  %v25 = vld [vmem:[%s1 + $0x18] sm:$0xff]
  %v26 = vld [vmem:[%s1 + $0x20] sm:$0xff]
  %v27 = vld [vmem:[%s1 + $0x28] sm:$0xff]
  %v28 = vld [vmem:[%s1 + $0x30] sm:$0xff]
  %v29 = vld [vmem:[%s1 + $0x38] sm:$0xff]
  %v30 = vld [vmem:[%s1 + $0x40] sm:$0xff]
  %v31 = vld [vmem:[%s1 + $0x48] sm:$0xff]
  %v32 = vld [vmem:[%s1 + $0x50] sm:$0xff]
  %v33 = vld [vmem:[%s1 + $0x58] sm:$0xff]
  %v34 = vld [vmem:[%s1 + $0x60] sm:$0xff]
  %v35 = vld [vmem:[%s1 + $0x68] sm:$0xff]
  %v36 = vld [vmem:[%s1 + $0x70] sm:$0xff]
  %v37 = vld [vmem:[%s1 + $0x78] sm:$0xff]
  %v38 = vld [vmem:[%s2] sm:$0x1]
  %v40 = vlaneseq
  %v41 = vshrl.u32 %v40, 7
  %v42 = vsub.s32 0, %v41
  %v43 = vrot.slane %v38, %v42
  %45 = vmatprep.subr.mxu0 0.0
  %46 = vmatpush1.msra.mxu0 %v37
  %47 = vmatprep.subr.mxu0 0.0
  %48 = vmatpush1.msra.mxu0 %v36
  %49 = vmatprep.subr.mxu0 0.0
  %50 = vmatpush1.msra.mxu0 %v35
  %51 = vmatprep.subr.mxu0 0.0
  %52 = vmatpush1.msra.mxu0 %v34
  %53 = vmatprep.subr.mxu0 0.0
  %54 = vmatpush1.msra.mxu0 %v33
  %55 = vmatprep.subr.mxu0 0.0
  %56 = vmatpush1.msra.mxu0 %v32
  %57 = vmatprep.subr.mxu0 0.0
  %58 = vmatpush1.msra.mxu0 %v31
  %59 = vmatprep.subr.mxu0 0.0
  %60 = vmatpush1.msra.mxu0 %v30
  %61 = vmatprep.subr.mxu0 0.0
  %62 = vmatpush1.msra.mxu0 %v29
  %63 = vmatprep.subr.mxu0 0.0
  %64 = vmatpush1.msra.mxu0 %v28
  %65 = vmatprep.subr.mxu0 0.0
  %66 = vmatpush1.msra.mxu0 %v27
  %67 = vmatprep.subr.mxu0 0.0
  %68 = vmatpush1.msra.mxu0 %v26
  %69 = vmatprep.subr.mxu0 0.0
  %70 = vmatpush1.msra.mxu0 %v25
  %71 = vmatprep.subr.mxu0 0.0
  %72 = vmatpush1.msra.mxu0 %v24
  %73 = vmatprep.subr.mxu0 0.0
  %74 = vmatpush1.msra.mxu0 %v23
  %75 = vmatprep.subr.mxu0 0.0
  %76 = vmatpush1.msra.mxu0 %v22
  %77 = vmatprep.subr.mxu0 0.0
  %78 = vmatpush2.msra.mxu0 0.0
  %79 = vmatprep.subr.mxu0 0.0
  %80 = vmatpush2.msra.mxu0 0.0
  %81 = vmatprep.subr.mxu0 0.0
  %82 = vmatpush2.msra.mxu0 0.0
  %83 = vmatprep.subr.mxu0 0.0
  %84 = vmatpush2.msra.mxu0 0.0
  %85 = vmatprep.subr.mxu0 0.0
  %86 = vmatpush2.msra.mxu0 0.0
  %87 = vmatprep.subr.mxu0 0.0
  %88 = vmatpush2.msra.mxu0 0.0
  %89 = vmatprep.subr.mxu0 0.0
  %90 = vmatpush2.msra.mxu0 0.0
  %91 = vmatprep.subr.mxu0 0.0
  %92 = vmatpush2.msra.mxu0 0.0
  %93 = vmatprep.subr.mxu0 0.0
  %94 = vmatpush2.msra.mxu0 0.0
  %95 = vmatprep.subr.mxu0 0.0
  %96 = vmatpush2.msra.mxu0 0.0
  %97 = vmatprep.subr.mxu0 0.0
  %98 = vmatpush2.msra.mxu0 0.0
  %99 = vmatprep.subr.mxu0 0.0
  %100 = vmatpush2.msra.mxu0 0.0
  %101 = vmatprep.subr.mxu0 0.0
  %102 = vmatpush2.msra.mxu0 0.0
  %103 = vmatprep.subr.mxu0 0.0
  %104 = vmatpush2.msra.mxu0 0.0
  %105 = vmatprep.subr.mxu0 0.0
  %106 = vmatpush2.msra.mxu0 0.0
  %107 = vmatprep.subr.mxu0 0.0
  %108 = vmatpush2.msra.mxu0 0.0
  %109 = vmatprep.mubr.f32.mxu0 0.0
  %110 = vmatmul.mubr.f32.gmra.mxu0 %v20
  %v111 = vpop.f32.mrf.mxu0
  %v112 = vadd.f32 %v43, %v111
  %v113 = vpop.f32.mrf.mxu0
  %114 = vmatprep.mubr.f32.mxu0 0.0
  %115 = vmatmul.mubr.f32.gmra.mxu0 %v21
  %v116 = vpop.f32.mrf.mxu0
  %v117 = vadd.f32 %v43, %v116
  %v118 = vpop.f32.mrf.mxu0
  %119 = vdwg.mxu0
  %v120 = vlaneseq
  %v121 = vand.u32 %v120, 127
  %vm122 = vcmp.lt.s32.totalorder %v121, 32
  %v123 = vsel %vm122, 1, 0
  %v124 = vcvt.s32.f32 %v123
  %125 = vadd.xlane.f32.xlu0 %v112
  %v126 = vpop.xlane.xlu0 %125
  %127 = vadd.xlane.f32.xlu0 %v117
  %v128 = vpop.xlane.xlu0 %127
  %v129 = vrcp.pop 32.0
  %v130 = vmul.f32 %v126, %v129
  %v131 = vmul.f32 %v128, %v129
  %v132 = vsub.f32 %v112, %v130
  %v133 = vsub.f32 %v117, %v131
  %v134 = vmul.f32 %v132, %v124
  %v135 = vmul.f32 %v133, %v124
  %v136 = vmul.f32 %v134, %v134
  %v137 = vmul.f32 %v135, %v135
  %138 = vadd.xlane.f32.xlu0 %v136
  %v139 = vpop.xlane.xlu0 %138
  %140 = vadd.xlane.f32.xlu0 %v137
  %v141 = vpop.xlane.xlu0 %140
  %v142 = vmul.f32 %v139, %v129
  %v143 = vmul.f32 %v141, %v129
  %v144 = vadd.f32 %v142, 1e-05
  %v145 = vadd.f32 %v143, 1e-05
  %v146 = vrsqrt.pop %v144
  %v147 = vrsqrt.pop %v145
  %v148 = vmul.f32 %v134, %v146
  %v149 = vmul.f32 %v135, %v147
  %v150 = vld [vmem:[%s3] sm:$0x1]
  %v152 = vlaneseq
  %v153 = vshrl.u32 %v152, 7
  %v154 = vsub.s32 0, %v153
  %v155 = vrot.slane %v150, %v154
  %v157 = vmul.f32 %v148, %v155
  %v158 = vmul.f32 %v149, %v155
  %v159 = vld [vmem:[%s4] sm:$0x1]
  %v161 = vlaneseq
  %v162 = vshrl.u32 %v161, 7
  %v163 = vsub.s32 0, %v162
  %v164 = vrot.slane %v159, %v163
  %v166 = vadd.f32 %v157, %v164
  %v167 = vadd.f32 %v158, %v164
  %v168 = vmax.f32 %v166, 0.0
  %v169 = vmax.f32 %v167, 0.0
  %170 = vst [vmem:[%s5] sm:$0xff] %v168
  %171 = vst [vmem:[%s5 + $0x8] sm:$0xff] %v169
  // Predicated region
  $region22: #{gnn_layer_forward.2} parent=0 // pred_check
    _
  $region23: #{gnn_layer_forward.2} parent=0 // pred_check_branch
    %173 = sbr.rel (0) target = $region25
  $region24: #{gnn_layer_forward.2} parent=0 // pred_region
    _
  $region25: #{gnn_layer_forward.2} parent=0 // pred_fallthru
    _
  // Predicated region
  $region26: #{gnn_layer_forward.2} parent=0 // pred_check
    _
  $region27: #{gnn_layer_forward.2} parent=0 // pred_check_branch
    %175 = sbr.rel (0) target = $region29
  $region28: #{gnn_layer_forward.2} parent=0 // pred_region
    _
  $region29: #{gnn_layer_forward.2} parent=0 // pred_fallthru
    _

// kernel: gnn_layer_forward.3
$region0: #{gnn_layer_forward.3}
  #allocation0 [shape = 'u32[]', space=smem, size = 0x4, offset = 0x4, fixed_abs, tag = 'smem constant byte address 0x4 - core index']
  #allocation1 [shape = 'u32[144,128]{1,0:T(1,128)}', space=vmem, size = 0x12000, scoped, tag = 'internal scratch']
  %s0 = inlined_call_operand.vmem [shape: bf16[16,16], index: 0, kind: input, shape index: {}]
  %s1 = inlined_call_operand.vmem [shape: f32[16,128], index: 1, kind: input, shape index: {}, may-alias: {1,2}]
  %s2 = inlined_call_operand.vmem [shape: f32[16,128], index: 2, kind: input, shape index: {}, may-alias: {1,2}]
  %s3 = inlined_call_operand.vmem [shape: f32[16,256], index: 3, kind: output, shape index: {}]
  %s4 = sld [smem:[#allocation0]]
  $region26: #{gnn_layer_forward.3} parent=0
    _
  %s6 = ssub.s32 1, %s4
  %s7 = scalar_select 0, %s6, %s4
  // Predicated region
  $region2: #{gnn_layer_forward.3} parent=0 // pred_check
    _
  $region3: #{gnn_layer_forward.3} parent=0 // pred_check_branch
    %9 = sbr.rel (0) target = $region5
  $region4: #{gnn_layer_forward.3} parent=0 // pred_region
    _
  $region5: #{gnn_layer_forward.3} parent=0 // pred_fallthru
    _
  // Predicated region
  $region6: #{gnn_layer_forward.3} parent=0 // pred_check
    _
  $region7: #{gnn_layer_forward.3} parent=0 // pred_check_branch
    %11 = sbr.rel (0) target = $region9
  $region8: #{gnn_layer_forward.3} parent=0 // pred_region
    _
  $region9: #{gnn_layer_forward.3} parent=0 // pred_fallthru
    _
  // Predicated region
  $region10: #{gnn_layer_forward.3} parent=0 // pred_check
    _
  $region11: #{gnn_layer_forward.3} parent=0 // pred_check_branch
    %13 = sbr.rel (0) target = $region13
  $region12: #{gnn_layer_forward.3} parent=0 // pred_region
    _
  $region13: #{gnn_layer_forward.3} parent=0 // pred_fallthru
    _
  %p14 = scmp.eq.s32.totalorder 0, 0
  // Predicated region
  $region14: #{gnn_layer_forward.3} parent=0 // pred_check
    %p15 = pneg %p14
  $region15: #{gnn_layer_forward.3} parent=0 // pred_check_branch
    %17 = sbr.rel (%p15) target = $region17
  $region16: #{gnn_layer_forward.3} parent=0 // pred_region
    %v18 = vld [vmem:[%s2] sm:$0xff]
    %v19 = vld [vmem:[%s2 + $0x8] sm:$0xff]
    %20 = vst [vmem:[%s3] sm:$0xff] %v18
    %21 = vst [vmem:[%s3 + $0x10] sm:$0xff] %v19
    %22 = vst [vmem:[%s3 + $0x8] sm:$0xff] 0.0
    %23 = vst [vmem:[%s3 + $0x18] sm:$0xff] 0.0
  $region17: #{gnn_layer_forward.3} parent=0 // pred_fallthru
    _
  %v24 = vld [vmem:[%s0] sm:$0xf]
  %v25 = vld [vmem:[%s0 + $0x4] sm:$0xf]
  %v26 = vunpack.c.l.bf16 %v24
  %v27 = vunpack.c.l.bf16 %v25
  %v28 = vld [vmem:[%s1] sm:$0x1]
  %30 = vset.pattern.permute.xlu0 0
  %31 = vperm.xlu0 %30, %v26
  %v32 = vpop.permute.xlu0 %31
  %35 = vset.pattern.permute.xlu0 0
  %36 = vperm.xlu0 %35, %v27
  %v37 = vpop.permute.xlu0 %36
  %v39 = vlaneseq
  %v40 = vshrl.u32 %v39, 7
  %v41 = vsub.s32 0, %v40
  %v42 = vrot.slane %v28, %v41
  %v43 = vmul.f32 %v32, %v42
  %v44 = vmul.f32 %v37, %v42
  %v45 = vmax.f32 %v43, 0.0
  %v46 = vmax.f32 %v44, 0.0
  %v47 = vld [vmem:[%s1 + $0x1] sm:$0x1]
  %48 = vset.pattern.permute.xlu0 1
  %49 = vperm.xlu0 %48, %v26
  %v50 = vpop.permute.xlu0 %49
  %52 = vset.pattern.permute.xlu0 1
  %53 = vperm.xlu0 %52, %v27
  %v54 = vpop.permute.xlu0 %53
  %v56 = vlaneseq
  %v57 = vshrl.u32 %v56, 7
  %v58 = vsub.s32 0, %v57
  %v59 = vrot.slane %v47, %v58
  %v60 = vmul.f32 %v50, %v59
  %v61 = vmul.f32 %v54, %v59
  %v62 = vmax.f32 %v45, %v60
  %v63 = vmax.f32 %v46, %v61
  %v64 = vld [vmem:[%s1 + $0x2] sm:$0x1]
  %65 = vset.pattern.permute.xlu0 2
  %66 = vperm.xlu0 %65, %v26
  %v67 = vpop.permute.xlu0 %66
  %69 = vset.pattern.permute.xlu0 2
  %70 = vperm.xlu0 %69, %v27
  %v71 = vpop.permute.xlu0 %70
  %v73 = vlaneseq
  %v74 = vshrl.u32 %v73, 7
  %v75 = vsub.s32 0, %v74
  %v76 = vrot.slane %v64, %v75
  %v77 = vmul.f32 %v67, %v76
  %v78 = vmul.f32 %v71, %v76
  %v79 = vmax.f32 %v62, %v77
  %v80 = vmax.f32 %v63, %v78
  %v81 = vld [vmem:[%s1 + $0x3] sm:$0x1]
  %82 = vset.pattern.permute.xlu0 3
  %83 = vperm.xlu0 %82, %v26
  %v84 = vpop.permute.xlu0 %83
  %86 = vset.pattern.permute.xlu0 3
  %87 = vperm.xlu0 %86, %v27
  %v88 = vpop.permute.xlu0 %87
  %v90 = vlaneseq
  %v91 = vshrl.u32 %v90, 7
  %v92 = vsub.s32 0, %v91
  %v93 = vrot.slane %v81, %v92
  %v94 = vmul.f32 %v84, %v93
  %v95 = vmul.f32 %v88, %v93
  %v96 = vmax.f32 %v79, %v94
  %v97 = vmax.f32 %v80, %v95
  %v98 = vld [vmem:[%s1 + $0x4] sm:$0x1]
  %99 = vset.pattern.permute.xlu0 4
  %100 = vperm.xlu0 %99, %v26
  %v101 = vpop.permute.xlu0 %100
  %103 = vset.pattern.permute.xlu0 4
  %104 = vperm.xlu0 %103, %v27
  %v105 = vpop.permute.xlu0 %104
  %v107 = vlaneseq
  %v108 = vshrl.u32 %v107, 7
  %v109 = vsub.s32 0, %v108
  %v110 = vrot.slane %v98, %v109
  %v111 = vmul.f32 %v101, %v110
  %v112 = vmul.f32 %v105, %v110
  %v113 = vmax.f32 %v96, %v111
  %v114 = vmax.f32 %v97, %v112
  %v115 = vld [vmem:[%s1 + $0x5] sm:$0x1]
  %116 = vset.pattern.permute.xlu0 5
  %117 = vperm.xlu0 %116, %v26
  %v118 = vpop.permute.xlu0 %117
  %120 = vset.pattern.permute.xlu0 5
  %121 = vperm.xlu0 %120, %v27
  %v122 = vpop.permute.xlu0 %121
  %v124 = vlaneseq
  %v125 = vshrl.u32 %v124, 7
  %v126 = vsub.s32 0, %v125
  %v127 = vrot.slane %v115, %v126
  %v128 = vmul.f32 %v118, %v127
  %v129 = vmul.f32 %v122, %v127
  %v130 = vmax.f32 %v113, %v128
  %v131 = vmax.f32 %v114, %v129
  %v132 = vld [vmem:[%s1 + $0x6] sm:$0x1]
  %133 = vset.pattern.permute.xlu0 6
  %134 = vperm.xlu0 %133, %v26
  %v135 = vpop.permute.xlu0 %134
  %137 = vset.pattern.permute.xlu0 6
  %138 = vperm.xlu0 %137, %v27
  %v139 = vpop.permute.xlu0 %138
  %v141 = vlaneseq
  %v142 = vshrl.u32 %v141, 7
  %v143 = vsub.s32 0, %v142
  %v144 = vrot.slane %v132, %v143
  %v145 = vmul.f32 %v135, %v144
  %v146 = vmul.f32 %v139, %v144
  %v147 = vmax.f32 %v130, %v145
  %v148 = vmax.f32 %v131, %v146
  %v149 = vld [vmem:[%s1 + $0x7] sm:$0x1]
  %150 = vset.pattern.permute.xlu0 7
  %151 = vperm.xlu0 %150, %v26
  %v152 = vpop.permute.xlu0 %151
  %154 = vset.pattern.permute.xlu0 7
  %155 = vperm.xlu0 %154, %v27
  %v156 = vpop.permute.xlu0 %155
  %v158 = vlaneseq
  %v159 = vshrl.u32 %v158, 7
  %v160 = vsub.s32 0, %v159
  %v161 = vrot.slane %v149, %v160
  %v162 = vmul.f32 %v152, %v161
  %v163 = vmul.f32 %v156, %v161
  %v164 = vmax.f32 %v147, %v162
  %v165 = vmax.f32 %v148, %v163
  %v166 = vld [vmem:[%s1 + $0x8] sm:$0x1]
  %167 = vset.pattern.permute.xlu0 8
  %168 = vperm.xlu0 %167, %v26
  %v169 = vpop.permute.xlu0 %168
  %171 = vset.pattern.permute.xlu0 8
  %172 = vperm.xlu0 %171, %v27
  %v173 = vpop.permute.xlu0 %172
  %v175 = vlaneseq
  %v176 = vshrl.u32 %v175, 7
  %v177 = vsub.s32 0, %v176
  %v178 = vrot.slane %v166, %v177
  %v179 = vmul.f32 %v169, %v178
  %v180 = vmul.f32 %v173, %v178
  %v181 = vmax.f32 %v164, %v179
  %v182 = vmax.f32 %v165, %v180
  %v183 = vld [vmem:[%s1 + $0x9] sm:$0x1]
  %184 = vset.pattern.permute.xlu0 9
  %185 = vperm.xlu0 %184, %v26
  %v186 = vpop.permute.xlu0 %185
  %188 = vset.pattern.permute.xlu0 9
  %189 = vperm.xlu0 %188, %v27
  %v190 = vpop.permute.xlu0 %189
  %v192 = vlaneseq
  %v193 = vshrl.u32 %v192, 7
  %v194 = vsub.s32 0, %v193
  %v195 = vrot.slane %v183, %v194
  %v196 = vmul.f32 %v186, %v195
  %v197 = vmul.f32 %v190, %v195
  %v198 = vmax.f32 %v181, %v196
  %v199 = vmax.f32 %v182, %v197
  %v200 = vld [vmem:[%s1 + $0xa] sm:$0x1]
  %201 = vset.pattern.permute.xlu0 10
  %202 = vperm.xlu0 %201, %v26
  %v203 = vpop.permute.xlu0 %202
  %205 = vset.pattern.permute.xlu0 10
  %206 = vperm.xlu0 %205, %v27
  %v207 = vpop.permute.xlu0 %206
  %v209 = vlaneseq
  %v210 = vshrl.u32 %v209, 7
  %v211 = vsub.s32 0, %v210
  %v212 = vrot.slane %v200, %v211
  %v213 = vmul.f32 %v203, %v212
  %v214 = vmul.f32 %v207, %v212
  %v215 = vmax.f32 %v198, %v213
  %v216 = vmax.f32 %v199, %v214
  %v217 = vld [vmem:[%s1 + $0xb] sm:$0x1]
  %218 = vset.pattern.permute.xlu0 11
  %219 = vperm.xlu0 %218, %v26
  %v220 = vpop.permute.xlu0 %219
  %222 = vset.pattern.permute.xlu0 11
  %223 = vperm.xlu0 %222, %v27
  %v224 = vpop.permute.xlu0 %223
  %v226 = vlaneseq
  %v227 = vshrl.u32 %v226, 7
  %v228 = vsub.s32 0, %v227
  %v229 = vrot.slane %v217, %v228
  %v230 = vmul.f32 %v220, %v229
  %v231 = vmul.f32 %v224, %v229
  %v232 = vmax.f32 %v215, %v230
  %v233 = vmax.f32 %v216, %v231
  %v234 = vld [vmem:[%s1 + $0xc] sm:$0x1]
  %235 = vset.pattern.permute.xlu0 12
  %236 = vperm.xlu0 %235, %v26
  %v237 = vpop.permute.xlu0 %236
  %239 = vset.pattern.permute.xlu0 12
  %240 = vperm.xlu0 %239, %v27
  %v241 = vpop.permute.xlu0 %240
  %v243 = vlaneseq
  %v244 = vshrl.u32 %v243, 7
  %v245 = vsub.s32 0, %v244
  %v246 = vrot.slane %v234, %v245
  %v247 = vmul.f32 %v237, %v246
  %v248 = vmul.f32 %v241, %v246
  %v249 = vmax.f32 %v232, %v247
  %v250 = vmax.f32 %v233, %v248
  %v251 = vld [vmem:[%s1 + $0xd] sm:$0x1]
  %252 = vset.pattern.permute.xlu0 13
  %253 = vperm.xlu0 %252, %v26
  %v254 = vpop.permute.xlu0 %253
  %256 = vset.pattern.permute.xlu0 13
  %257 = vperm.xlu0 %256, %v27
  %v258 = vpop.permute.xlu0 %257
  %v260 = vlaneseq
  %v261 = vshrl.u32 %v260, 7
  %v262 = vsub.s32 0, %v261
  %v263 = vrot.slane %v251, %v262
  %v264 = vmul.f32 %v254, %v263
  %v265 = vmul.f32 %v258, %v263
  %v266 = vmax.f32 %v249, %v264
  %v267 = vmax.f32 %v250, %v265
  %v268 = vld [vmem:[%s1 + $0xe] sm:$0x1]
  %269 = vset.pattern.permute.xlu0 14
  %270 = vperm.xlu0 %269, %v26
  %v271 = vpop.permute.xlu0 %270
  %273 = vset.pattern.permute.xlu0 14
  %274 = vperm.xlu0 %273, %v27
  %v275 = vpop.permute.xlu0 %274
  %v277 = vlaneseq
  %v278 = vshrl.u32 %v277, 7
  %v279 = vsub.s32 0, %v278
  %v280 = vrot.slane %v268, %v279
  %v281 = vmul.f32 %v271, %v280
  %v282 = vmul.f32 %v275, %v280
  %v283 = vmax.f32 %v266, %v281
  %v284 = vmax.f32 %v267, %v282
  %v285 = vld [vmem:[%s1 + $0xf] sm:$0x1]
  %286 = vset.pattern.permute.xlu0 15
  %287 = vperm.xlu0 %286, %v26
  %v288 = vpop.permute.xlu0 %287
  %290 = vset.pattern.permute.xlu0 15
  %291 = vperm.xlu0 %290, %v27
  %v292 = vpop.permute.xlu0 %291
  %v294 = vlaneseq
  %v295 = vshrl.u32 %v294, 7
  %v296 = vsub.s32 0, %v295
  %v297 = vrot.slane %v285, %v296
  %v298 = vmul.f32 %v288, %v297
  %v299 = vmul.f32 %v292, %v297
  %v300 = vmax.f32 %v283, %v298
  %v301 = vmax.f32 %v284, %v299
  %v302 = vld [vmem:[%s3 + $0x8] sm:$0xff]
  %v303 = vld [vmem:[%s3 + $0x18] sm:$0xff]
  %v304 = vmax.f32 %v302, %v300
  %v305 = vmax.f32 %v303, %v301
  %306 = vst [vmem:[%s3 + $0x8] sm:$0xff] %v304
  %307 = vst [vmem:[%s3 + $0x18] sm:$0xff] %v305
  // Predicated region
  $region18: #{gnn_layer_forward.3} parent=0 // pred_check
    _
  $region19: #{gnn_layer_forward.3} parent=0 // pred_check_branch
    %309 = sbr.rel (0) target = $region21
  $region20: #{gnn_layer_forward.3} parent=0 // pred_region
    _
  $region21: #{gnn_layer_forward.3} parent=0 // pred_fallthru
    _
  // Predicated region
  $region22: #{gnn_layer_forward.3} parent=0 // pred_check
    _
  $region23: #{gnn_layer_forward.3} parent=0 // pred_check_branch
    %311 = sbr.rel (0) target = $region25
  $region24: #{gnn_layer_forward.3} parent=0 // pred_region
    _
  $region25: #{gnn_layer_forward.3} parent=0 // pred_fallthru
    _

</llo_original>
